<compile_context>
chip_gen: v6e
topology: v6e:2x2x1
jax: 0.10.0
libtpu: 0.0.40
codegen_flags: <defaults>
</compile_context>

<pallas_src>
import functools

import jax
import jax.numpy as jnp
import numpy as np
from jax.experimental import pallas as pl
from jax.experimental.pallas import tpu as pltpu


def _sublane_multiple(dtype):
    itemsize = jnp.dtype(dtype).itemsize
    return max(8, 32 // itemsize)       # f32 -> 8, bf16 -> 16, int8/fp8 -> 32


def _vmem_capacity_bytes():
    try:
        return int(pltpu.get_tpu_info().vmem_capacity_bytes)
    except Exception:
        return 128 * 1024 * 1024        # conservative default (v5e/v6e class)


def _budgets():
    """(per-input f32-footprint block bytes, vmem_limit_bytes, min_tiles)."""
    cap = _vmem_capacity_bytes()
    if cap <= 64 * 1024 * 1024:
        # v7x-class: 64 MiB VMEM per TensorCore, 2 TCs per chip.
        return 3 * 1024 * 1024, 48 * 1024 * 1024, 4
    # v5e / v6e-class: 128 MiB VMEM, single TensorCore.
    return 6 * 1024 * 1024, 96 * 1024 * 1024, 1


def _pick_block_batch(n, c, dtype, block_bytes_target, min_tiles):
    sublane = _sublane_multiple(dtype)
    # Budget on the f32 intermediate footprint (everything is cast to f32 in
    # the kernel), NOT on the input itemsize.
    f32_row_bytes = c * 4
    rows = max(block_bytes_target // max(1, f32_row_bytes), sublane)
    rows = (rows // sublane) * sublane
    # No point exceeding the (sublane-rounded) batch size.
    n_cover = ((n + sublane - 1) // sublane) * sublane
    rows = min(rows, n_cover)
    # On 2-TC parts, prefer >= min_tiles grid steps so both cores get work.
    if min_tiles > 1 and n_cover > sublane:
        split_rows = (n_cover + min_tiles - 1) // min_tiles
        split_rows = ((split_rows + sublane - 1) // sublane) * sublane
        rows = min(rows, max(split_rows, sublane))
    return max(rows, sublane)


def _kd_loss_kernel(x_ref, t_ref, o_ref, *, inv_temp, n_rows, block_batch):
    i = pl.program_id(0)

    x = x_ref[...].astype(jnp.float32) * inv_temp
    t = t_ref[...].astype(jnp.float32) * inv_temp
    # TODO(synk): on bf16-VPU parts (v6e/v7x) the pre-shift (x - x_max) could
    # stay 16-bit to halve the largest temporaries; skipped here pending a
    # precision check against the f32 reference.

    # log_softmax(input / T): log_p = x_shift - x_lse
    x_max = jnp.max(x, axis=-1, keepdims=True)
    x_shift = x - x_max
    x_lse = jnp.log(jnp.sum(jnp.exp(x_shift), axis=-1, keepdims=True))

    # softmax(target / T): q = t_exp / t_sum, log_q = t_shift - log(t_sum)
    t_max = jnp.max(t, axis=-1, keepdims=True)
    t_shift = t - t_max
    t_exp = jnp.exp(t_shift)
    t_sum = jnp.sum(t_exp, axis=-1, keepdims=True)

    # sum_c q * (log_q - log_p)
    #   = (1 / t_sum) * sum_c t_exp * (t_shift - x_shift)  +  (x_lse - log t_sum)
    # Per-row scalar term is hoisted out of the lane reduction: no (B,1)->(B,C)
    # broadcast, no per-element divide, no materialized q / log_q / log_p.
    inner = jnp.sum(t_exp * (t_shift - x_shift), axis=-1, keepdims=True)  # (B,1)
    row_kl = (inner * pl.reciprocal(t_sum, approx=False)
              + (x_lse - jnp.log(t_sum)))                                 # (B,1)

    # Mask rows past the real batch (cdiv grid overhang / padded tail). All
    # reductions above are per-row, so garbage tail rows cannot leak in.
    row_idx = i * block_batch + jax.lax.broadcasted_iota(
        jnp.int32, row_kl.shape, 0)
    row_kl = jnp.where(row_idx < n_rows, row_kl, 0.0)

    partial = jnp.sum(row_kl)                               # this tile's sum

    # Broadcast the partial into this tile's private (1, 8, 128) block; the
    # wrapper reads element [i, 0, 0], so the final sum is exact and no
    # iota/compare/select epilogue is needed. Grid axis stays "parallel".
    o_ref[...] = jnp.full((1, 8, 128), partial, dtype=jnp.float32)


def kd_loss(inp, target, temp_factor, *, block_batch=None):
    """Pallas implementation of KDLoss.forward. inp/target: (N, C) logits."""
    assert inp.shape == target.shape and inp.ndim == 2
    assert inp.dtype == target.dtype
    n, c = inp.shape

    block_bytes_target, vmem_limit_bytes, min_tiles = _budgets()
    sublane = _sublane_multiple(inp.dtype)
    if block_batch is None:
        block_batch = _pick_block_batch(n, c, inp.dtype,
                                        block_bytes_target, min_tiles)
    else:
        block_batch = max(sublane, (int(block_batch) // sublane) * sublane)

    num_tiles = pl.cdiv(n, block_batch)

    kernel = functools.partial(
        _kd_loss_kernel,
        inv_temp=float(1.0 / float(temp_factor)),
        n_rows=int(n),
        block_batch=int(block_batch),
    )

    itemsize = jnp.dtype(inp.dtype).itemsize
    cost = pl.CostEstimate(
        flops=10 * n * c,
        transcendentals=2 * n * c,
        bytes_accessed=2 * n * c * itemsize + num_tiles * 8 * 128 * 4,
    )

    partials = pl.pallas_call(
        kernel,
        out_shape=jax.ShapeDtypeStruct((num_tiles, 8, 128), jnp.float32),
        grid_spec=pltpu.PrefetchScalarGridSpec(
            num_scalar_prefetch=0,
            grid=(num_tiles,),
            in_specs=[
                pl.BlockSpec((block_batch, c), lambda i: (i, 0)),
                pl.BlockSpec((block_batch, c), lambda i: (i, 0)),
            ],
            out_specs=pl.BlockSpec((1, 8, 128), lambda i: (i, 0, 0)),
        ),
        compiler_params=pltpu.CompilerParams(
            dimension_semantics=("parallel",),   # independent tiles -> megacore
            vmem_limit_bytes=vmem_limit_bytes,
        ),
        cost_estimate=cost,
    )(inp, target)

    # TODO(synk): for very large class dims (C >= ~32K, vocab-level KD), add a
    # class-axis grid dimension with an online-softmax formulation instead of
    # keeping a full-C row per block.
    scale = jnp.float32(float(temp_factor) ** 2 / n)
    return jnp.sum(partials[:, 0, 0]) * scale


def _kd_loss_ref(inp, target, temp_factor):
    x = inp.astype(jnp.float32) / temp_factor
    t = target.astype(jnp.float32) / temp_factor
    log_p = jax.nn.log_softmax(x, axis=1)
    q = jax.nn.softmax(t, axis=1)
    log_q = jax.nn.log_softmax(t, axis=1)
    kl = jnp.sum(q * (log_q - log_p))
    return kl * temp_factor ** 2 / inp.shape[0]


def _check(name, loss, ref):
    loss = jax.block_until_ready(loss)
    if not np.allclose(np.asarray(loss), np.asarray(ref), rtol=1e-4, atol=1e-5):
        raise AssertionError(f"{name} mismatch: pallas={loss} ref={ref}")


if __name__ == "__main__":
    key = jax.random.PRNGKey(0)
    k1, k2, k3, k4, k5, k6 = jax.random.split(key, 6)

    # 1) small f32 case, default (auto-picked) block size.
    N, C, TEMP = 16, 128, 4.0
    student = jax.random.normal(k1, (N, C), dtype=jnp.float32)
    teacher = jax.random.normal(k2, (N, C), dtype=jnp.float32) * 2.0
    _check("f32", kd_loss(student, teacher, TEMP),
           _kd_loss_ref(student, teacher, TEMP))

    # 2) batch not divisible by block, odd class count -> exercises masking.
    N2, C2, TEMP2 = 20, 48, 2.0
    s2 = jax.random.normal(k3, (N2, C2), dtype=jnp.float32)
    t2 = jax.random.normal(k4, (N2, C2), dtype=jnp.float32) * 1.5
    _check("mask", kd_loss(s2, t2, TEMP2, block_batch=8),
           _kd_loss_ref(s2, t2, TEMP2))

    # 3) bf16 logits fed straight to the kernel (cast to f32 inside).
    N3, C3, TEMP3 = 32, 256, 4.0
    s3 = jax.random.normal(k5, (N3, C3), dtype=jnp.float32).astype(jnp.bfloat16)
    t3 = (jax.random.normal(k6, (N3, C3), dtype=jnp.float32) * 2.0).astype(
        jnp.bfloat16)
    _check("bf16", kd_loss(s3, t3, TEMP3), _kd_loss_ref(s3, t3, TEMP3))

    print("KERNEL_OK")
</pallas_src>

<mosaic_0001>
module attributes {stable_mosaic.version = 11 : i64} {
  func.func @_kd_loss_kernel(%arg0: i32, %arg1: memref<16x128xf32, #tpu.memory_space<vmem>>, %arg2: memref<16x128xf32, #tpu.memory_space<vmem>>, %arg3: memref<1x8x128xf32, #tpu.memory_space<vmem>>) attributes {dimension_semantics = [#tpu.dimension_semantics<parallel>], iteration_bounds = array<i64: 1>, scalar_prefetch = 0 : i64, scratch_operands = 0 : i64, tpu.core_type = #tpu.core_type<tc>, window_params = [{transform_indices = @transform_0, window_bounds = array<i64: 16, 128>}, {transform_indices = @transform_1, window_bounds = array<i64: 16, 128>}, {transform_indices = @transform_2, window_bounds = array<i64: 1, 8, 128>}]} {
    %c0 = arith.constant 0 : index
    %c0_0 = arith.constant 0 : index
    %0 = vector.load %arg1[%c0, %c0_0] : memref<16x128xf32, #tpu.memory_space<vmem>>, vector<16x128xf32>
    %cst = arith.constant 2.500000e-01 : f32
    %1 = vector.broadcast %cst : f32 to vector<16x128xf32>
    %2 = arith.mulf %0, %1 : vector<16x128xf32>
    %c0_1 = arith.constant 0 : index
    %c0_2 = arith.constant 0 : index
    %3 = vector.load %arg2[%c0_1, %c0_2] : memref<16x128xf32, #tpu.memory_space<vmem>>, vector<16x128xf32>
    %cst_3 = arith.constant 2.500000e-01 : f32
    %4 = vector.broadcast %cst_3 : f32 to vector<16x128xf32>
    %5 = arith.mulf %3, %4 : vector<16x128xf32>
    %cst_4 = arith.constant dense<0xFF800000> : vector<16xf32>
    %6 = vector.multi_reduction <maximumf>, %2, %cst_4 [1] : vector<16x128xf32> to vector<16xf32>
    %7 = vector.shape_cast %6 : vector<16xf32> to vector<16x1xf32>
    %8 = vector.broadcast %7 : vector<16x1xf32> to vector<16x128xf32>
    %9 = arith.subf %2, %8 : vector<16x128xf32>
    %10 = math.exp %9 : vector<16x128xf32>
    %cst_5 = arith.constant dense<0.000000e+00> : vector<16xf32>
    %11 = vector.multi_reduction <add>, %10, %cst_5 [1] : vector<16x128xf32> to vector<16xf32>
    %12 = vector.shape_cast %11 : vector<16xf32> to vector<16x1xf32>
    %13 = math.log %12 : vector<16x1xf32>
    %cst_6 = arith.constant dense<0xFF800000> : vector<16xf32>
    %14 = vector.multi_reduction <maximumf>, %5, %cst_6 [1] : vector<16x128xf32> to vector<16xf32>
    %15 = vector.shape_cast %14 : vector<16xf32> to vector<16x1xf32>
    %16 = vector.broadcast %15 : vector<16x1xf32> to vector<16x128xf32>
    %17 = arith.subf %5, %16 : vector<16x128xf32>
    %18 = math.exp %17 : vector<16x128xf32>
    %cst_7 = arith.constant dense<0.000000e+00> : vector<16xf32>
    %19 = vector.multi_reduction <add>, %18, %cst_7 [1] : vector<16x128xf32> to vector<16xf32>
    %20 = vector.shape_cast %19 : vector<16xf32> to vector<16x1xf32>
    %21 = arith.subf %17, %9 : vector<16x128xf32>
    %22 = arith.mulf %18, %21 : vector<16x128xf32>
    %cst_8 = arith.constant dense<0.000000e+00> : vector<16xf32>
    %23 = vector.multi_reduction <add>, %22, %cst_8 [1] : vector<16x128xf32> to vector<16xf32>
    %24 = vector.shape_cast %23 : vector<16xf32> to vector<16x1xf32>
    %25 = tpu.reciprocal %20 : vector<16x1xf32> -> vector<16x1xf32>
    %26 = arith.mulf %24, %25 : vector<16x1xf32>
    %27 = math.log %20 : vector<16x1xf32>
    %28 = arith.subf %13, %27 : vector<16x1xf32>
    %29 = arith.addf %26, %28 : vector<16x1xf32>
    %c16_i32 = arith.constant 16 : i32
    %30 = arith.muli %arg0, %c16_i32 : i32
    %31 = tpu.iota {dimensions = array<i32: 0>} : vector<16x1xi32>
    %32 = vector.broadcast %30 : i32 to vector<16x1xi32>
    %33 = arith.addi %32, %31 : vector<16x1xi32>
    %c16_i32_9 = arith.constant 16 : i32
    %34 = vector.broadcast %c16_i32_9 : i32 to vector<16x1xi32>
    %35 = arith.cmpi slt, %33, %34 : vector<16x1xi32>
    %cst_10 = arith.constant 0.000000e+00 : f32
    %36 = vector.broadcast %cst_10 : f32 to vector<16x1xf32>
    %37 = arith.select %35, %29, %36 : vector<16x1xi1>, vector<16x1xf32>
    %38 = vector.shape_cast %37 : vector<16x1xf32> to vector<1x16x1xf32>
    %cst_11 = arith.constant dense<0.000000e+00> : vector<1xf32>
    %39 = vector.multi_reduction <add>, %38, %cst_11 [1, 2] : vector<1x16x1xf32> to vector<1xf32>
    %40 = vector.shape_cast %39 : vector<1xf32> to vector<1x1x1xf32>
    %41 = vector.extract %40[0, 0, 0] : f32 from vector<1x1x1xf32>
    %42 = vector.broadcast %41 : f32 to vector<1x8x128xf32>
    %c0_12 = arith.constant 0 : index
    %c0_13 = arith.constant 0 : index
    %c0_14 = arith.constant 0 : index
    %43 = vector.load %arg3[%c0_12, %c0_13, %c0_14] : memref<1x8x128xf32, #tpu.memory_space<vmem>>, vector<1x8x128xf32>
    tpu.vector_store %arg3[%c0_12, %c0_13, %c0_14], %42 {strides = array<i32>} : memref<1x8x128xf32, #tpu.memory_space<vmem>>, vector<1x8x128xf32>,
    return
  }
  func.func @transform_0(%arg0: i32) -> (i32, i32) {
    %c0_i32 = arith.constant 0 : i32
    %c0_i32_0 = arith.constant 0 : i32
    return %arg0, %c0_i32 : i32, i32
  }
  func.func @transform_1(%arg0: i32) -> (i32, i32) {
    %c0_i32 = arith.constant 0 : i32
    %c0_i32_0 = arith.constant 0 : i32
    return %arg0, %c0_i32 : i32, i32
  }
  func.func @transform_2(%arg0: i32) -> (i32, i32, i32) {
    %c0_i32 = arith.constant 0 : i32
    %c0_i32_0 = arith.constant 0 : i32
    %c0_i32_1 = arith.constant 0 : i32
    return %arg0, %c0_i32, %c0_i32_0 : i32, i32, i32
  }
}

</mosaic_0001>

<llo_original>
// kernel: tpu_custom_call.1
$region0: #{tpu_custom_call.1}
  #allocation0 [shape = 'u32[]', space=smem, size = 0x4, offset = 0x4, fixed_abs, tag = 'smem constant byte address 0x4 - core index']
  #allocation1 [shape = 'u32[144,128]{1,0:T(1,128)}', space=vmem, size = 0x12000, scoped, tag = 'internal scratch']
  %s0 = inlined_call_operand.hbm [shape: f32[16,128], index: 0, kind: input, shape index: {}]
  %s1 = inlined_call_operand.hbm [shape: f32[16,128], index: 1, kind: input, shape index: {}]
  %s2 = inlined_call_operand.hbm [shape: f32[1,8,128], index: 2, kind: output, shape index: {}]
  %s3 = sld [smem:[#allocation0]]
  $region26: #{tpu_custom_call.1} parent=0
    _
  %s5 = ssub.s32 1, %s3
  %s6 = scalar_select 0, %s5, %s3
  $region1: #{tpu_custom_call.1} parent=0
    #allocation2 [shape = 'u8[8192]{0}', space=vmem, size = 0x2000, scoped, tag = 'input window, operand 0, single buffered']
    #allocation3 [shape = 's32[1]{0}', space=sflag, size = 0x4, scoped, tag = 'scoped memory for tpu_custom_call.1']
    #allocation4 [shape = 's32[1]{0}', space=sflag, size = 0x4, scoped, tag = 'scoped memory for tpu_custom_call.1']
    #allocation5 [shape = 'u8[8192]{0}', space=vmem, size = 0x2000, scoped, tag = 'input window, operand 1, single buffered']
    #allocation6 [shape = 's32[1]{0}', space=sflag, size = 0x4, scoped, tag = 'scoped memory for tpu_custom_call.1']
    #allocation7 [shape = 'u8[4096]{0}', space=vmem, size = 0x1000, scoped, tag = 'output window, operand 0, single buffered']
    %7 = vsyncpa [#allocation3], 0
    %8 = vsyncpa [#allocation6], 0
    %9 = vsyncpa [#allocation4], 0
    // Predicated region
    $region2: #{tpu_custom_call.1} parent=1 // pred_check
      _
    $region3: #{tpu_custom_call.1} parent=1 // pred_check_branch
      %11 = sbr.rel (0) target = $region5
    $region4: #{tpu_custom_call.1} parent=1 // pred_region
      %s13 = ssub.s32 256, 256
      %14 = vsyncadd [#allocation3], %s13
      %s15 = sshll.u32 [#allocation2], 4
      %s16 = int_to_ptr.vmem [resolvable:$true] %s15
      %21 = dma.hbm_to_vmem [thread:$0]  %s0, 256, %s16, [#allocation3], 128, 128, 8
    $region5: #{tpu_custom_call.1} parent=1 // pred_fallthru
      _
    // Predicated region
    $region6: #{tpu_custom_call.1} parent=1 // pred_check
      _
    $region7: #{tpu_custom_call.1} parent=1 // pred_check_branch
      %23 = sbr.rel (0) target = $region9
    $region8: #{tpu_custom_call.1} parent=1 // pred_region
      %s25 = ssub.s32 256, 256
      %26 = vsyncadd [#allocation6], %s25
      %s27 = sshll.u32 [#allocation5], 4
      %s28 = int_to_ptr.vmem [resolvable:$true] %s27
      %33 = dma.hbm_to_vmem [thread:$0]  %s1, 256, %s28, [#allocation6], 128, 128, 8
    $region9: #{tpu_custom_call.1} parent=1 // pred_fallthru
      _
    // Predicated region
    $region10: #{tpu_custom_call.1} parent=1 // pred_check
      _
    $region11: #{tpu_custom_call.1} parent=1 // pred_check_branch
      %35 = sbr.rel (0) target = $region13
    $region12: #{tpu_custom_call.1} parent=1 // pred_region
      %36 = dma.done [#allocation3], 256
    $region13: #{tpu_custom_call.1} parent=1 // pred_fallthru
      _
    // Predicated region
    $region14: #{tpu_custom_call.1} parent=1 // pred_check
      _
    $region15: #{tpu_custom_call.1} parent=1 // pred_check_branch
      %38 = sbr.rel (0) target = $region17
    $region16: #{tpu_custom_call.1} parent=1 // pred_region
      %39 = dma.done [#allocation6], 256
    $region17: #{tpu_custom_call.1} parent=1 // pred_fallthru
      _
    %v40 = vld [vmem:[#allocation2] sm:$0xff]
    %v41 = vld [vmem:[#allocation2 + $0x8] sm:$0xff]
    %v42 = vmul.f32 %v40, 0.25
    %v43 = vmul.f32 %v41, 0.25
    %v44 = vld [vmem:[#allocation5] sm:$0xff]
    %v45 = vld [vmem:[#allocation5 + $0x8] sm:$0xff]
    %v46 = vmul.f32 %v44, 0.25
    %v47 = vmul.f32 %v45, 0.25
    %48 = vmax.xlane.f32.xlu0 %v42
    %v49 = vpop.xlane.xlu0 %48
    %50 = vmax.xlane.f32.xlu0 %v43
    %v51 = vpop.xlane.xlu0 %50
    %v52 = vsub.f32 %v42, %v49
    %v53 = vsub.f32 %v43, %v51
    %v54 = vmul.f32 %v52, 1.442695
    %v55 = vpow.pop %v54
    %v56 = vmul.f32 %v53, 1.442695
    %v57 = vpow.pop %v56
    %58 = vadd.xlane.f32.xlu0 %v55
    %v59 = vpop.xlane.xlu0 %58
    %60 = vadd.xlane.f32.xlu0 %v57
    %v61 = vpop.xlane.xlu0 %60
    %v62 = vlog2.pop %v59
    %v63 = vmul.f32 %v62, 0.6931472
    %v64 = vlog2.pop %v61
    %v65 = vmul.f32 %v64, 0.6931472
    %66 = vmax.xlane.f32.xlu0 %v46
    %v67 = vpop.xlane.xlu0 %66
    %68 = vmax.xlane.f32.xlu0 %v47
    %v69 = vpop.xlane.xlu0 %68
    %v70 = vsub.f32 %v46, %v67
    %v71 = vsub.f32 %v47, %v69
    %v72 = vmul.f32 %v70, 1.442695
    %v73 = vpow.pop %v72
    %v74 = vmul.f32 %v71, 1.442695
    %v75 = vpow.pop %v74
    %76 = vadd.xlane.f32.xlu0 %v73
    %v77 = vpop.xlane.xlu0 %76
    %78 = vadd.xlane.f32.xlu0 %v75
    %v79 = vpop.xlane.xlu0 %78
    %v80 = vsub.f32 %v70, %v52
    %v81 = vsub.f32 %v71, %v53
    %v82 = vmul.f32 %v73, %v80
    %v83 = vmul.f32 %v75, %v81
    %84 = vadd.xlane.f32.xlu0 %v82
    %v85 = vpop.xlane.xlu0 %84
    %86 = vadd.xlane.f32.xlu0 %v83
    %v87 = vpop.xlane.xlu0 %86
    %v88 = vrcp.pop %v77
    %v89 = vrcp.pop %v79
    %v90 = vmul.f32 %v85, %v88
    %v91 = vmul.f32 %v87, %v89
    %v92 = vlog2.pop %v77
    %v93 = vmul.f32 %v92, 0.6931472
    %v94 = vlog2.pop %v79
    %v95 = vmul.f32 %v94, 0.6931472
    %v96 = vsub.f32 %v63, %v93
    %v97 = vsub.f32 %v65, %v95
    %v98 = vadd.f32 %v90, %v96
    %v99 = vadd.f32 %v91, %v97
    %s100 = smul.u32 0, 16
    %v101 = vlaneseq
    %v102 = vshrl.u32 %v101, 7
    %v103 = vadd.s32 %v102, 8
    %v104 = vstv %s100
    %v105 = vadd.s32 %v104, %v102
    %v106 = vadd.s32 %v104, %v103
    %vm107 = vcmp.lt.s32.totalorder %v105, 16
    %vm108 = vcmp.lt.s32.totalorder %v106, 16
    %v109 = vsel %vm107, %v98, 0.0
    %v110 = vsel %vm108, %v99, 0.0
    %vm111 = vcmask 7168
    %v112 = vsel %vm111, %v109, 0.0
    %v113 = vsel %vm111, %v110, 0.0
    %v114 = vadd.f32 %v112, %v113
    %115 = vadd.xlane.f32.xlu0 %v114
    %v116 = vpop.xlane.xlu0 %115
    %v117 = vrot.slane %v116, 4
    %v118 = vadd.f32 %v116, %v117
    %v119 = vrot.slane %v118, 2
    %v120 = vadd.f32 %v118, %v119
    %v121 = vrot.slane %v120, 1
    %v122 = vadd.f32 %v120, %v121
    %s123 = vtos %v122
    %v124 = vstv %s123
    %125 = vst [vmem:[#allocation7] sm:$0xff] %v124
    // Predicated region
    $region18: #{tpu_custom_call.1} parent=1 // pred_check
      _
    $region19: #{tpu_custom_call.1} parent=1 // pred_check_branch
      %127 = sbr.rel (0) target = $region21
    $region20: #{tpu_custom_call.1} parent=1 // pred_region
      %s129 = ssub.s32 128, 128
      %130 = vsyncadd [#allocation4], %s129
      %s132 = sshll.u32 [#allocation7], 4
      %s133 = int_to_ptr.vmem [resolvable:$true] %s132
      %135 = dma.vmem_to_hbm [thread:$0]  %s133, 128, %s2, [#allocation4]
    $region21: #{tpu_custom_call.1} parent=1 // pred_fallthru
      _
    // Predicated region
    $region22: #{tpu_custom_call.1} parent=1 // pred_check
      _
    $region23: #{tpu_custom_call.1} parent=1 // pred_check_branch
      %137 = sbr.rel (0) target = $region25
    $region24: #{tpu_custom_call.1} parent=1 // pred_region
      %138 = dma.done [#allocation4], 128
    $region25: #{tpu_custom_call.1} parent=1 // pred_fallthru
      _
    %139 = vsyncpa [#allocation3], 1
    %140 = vsyncpa [#allocation6], 1
    %141 = vsyncpa [#allocation4], 1

</llo_original>
